<compile_context>
chip_gen: v7x
topology: tpu7x:2x2x1
jax: 0.10.0
libtpu: 0.0.40
codegen_flags: <defaults>
</compile_context>

<pallas_src>
import functools

import jax
import jax.numpy as jnp
from jax import lax
from jax.experimental import pallas as pl
from jax.experimental.pallas import tpu as pltpu

_LANE = 128


# ------------------------------ activations ---------------------------------
def _act(name, x):
    """Matches function_act() in the PyTorch source ('' -> Identity)."""
    if name == "tanh":
        return jnp.tanh(x)
    if name == "relu":
        return jnp.maximum(x, 0.0)
    if name == "sin":
        return jnp.sin(1.0 * x)
    if name == "softplus":
        return jnp.logaddexp(x, 0.0)
    return x


def _act_grad_mul(name, g, z):
    """Return g * d(act)/dz evaluated at the pre-activation z."""
    if name == "tanh":
        t = jnp.tanh(z)
        return g * (1.0 - t * t)
    if name == "relu":
        return jnp.where(z > 0.0, g, 0.0)
    if name == "sin":
        return g * jnp.cos(1.0 * z)
    if name == "softplus":
        return g * (1.0 / (1.0 + jnp.exp(-z)))
    return g  # identity


# -------------------------------- kernel ------------------------------------
def _hnn_grad_kernel(*refs, hidden_acts):
    """Fused HNN forward (batch in lanes).

    refs = (x_ref,                          # (c_in, T) input tile
            W0, b0, ..., W_{n-1}, b_{n-1},  # hidden layers, PyTorch (out, in)
            g_seed,                         # (E, 1) = column sums of last W
            out_ref)                        # (c_in, T)
    """
    x_ref = refs[0]
    out_ref = refs[-1]
    g_seed_ref = refs[-2]
    layer_refs = refs[1:-2]
    n = len(layer_refs) // 2
    assert n == len(hidden_acts)

    x = x_ref[...].astype(jnp.float32)           # (c_in, T)
    c_in, t_w = x.shape

    # ---- entry Sin + forward through hidden layers (keep pre-activations) ----
    h = jnp.sin(1.0 * x)
    zs = []
    for li in range(n):
        w = layer_refs[2 * li][...]              # (out, in)
        b = layer_refs[2 * li + 1][...]          # (out, 1) -> lane broadcast
        z = jnp.dot(w, h, preferred_element_type=jnp.float32) + b
        zs.append(z)
        h = _act(hidden_acts[li], z)
    # Final Linear's forward output is never needed (H is not returned and
    # dH/d(its pre-activation) == 1), so it is skipped.

    # ---- analytic backward (VJP) for dH/dx ----
    seed = g_seed_ref[...]                       # (E, 1)
    g = jnp.broadcast_to(seed, (seed.shape[0], t_w))
    for li in range(n - 1, -1, -1):
        g = _act_grad_mul(hidden_acts[li], g, zs[li])
        w = layer_refs[2 * li][...]              # (out, in)
        # grad wrt layer input = w^T @ g  -> (in, T), no materialized transpose
        g = lax.dot_general(w, g, (((0,), (0,)), ((), ())),
                            preferred_element_type=jnp.float32)
    dh = g * jnp.cos(1.0 * x)                    # d sin(x)/dx chain, (c_in, T)

    # ---- symplectic map: out = J @ dh,  J = cat([I[half:], -I[:half]]) ----
    half = c_in // 2
    out_ref[0:c_in - half, :] = dh[half:, :].astype(out_ref.dtype)
    out_ref[c_in - half:, :] = (-dh[:half, :]).astype(out_ref.dtype)


# ------------------------------ parameters -----------------------------------
def init_hnn_params(key, c_in, hidden_dim, acts):
    """Mirror HNN.__init__ / mlp.__init__: weight ~ N(0, 0.1), bias = 0.

    mlp(c_in, E, 1, acts):
        Linear(c_in, E) + act(acts[0])
        for i in 1..len(acts)-2: Linear(E, E) + (act(acts[i]) if acts[i] else Id)
        Linear(E, 1)                 # acts[-1] unused, exactly like PyTorch
    Weights kept in PyTorch (out, in) layout; biases stored as (out, 1).
    """
    dims = [(c_in, hidden_dim)]
    layer_acts = [acts[0]]
    for i in range(1, len(acts) - 1):
        dims.append((hidden_dim, hidden_dim))
        layer_acts.append(acts[i])
    dims.append((hidden_dim, 1))
    layer_acts.append("")                        # final Linear: no activation
    params = []
    for (din, dout) in dims:
        key, sub = jax.random.split(key)
        w = 0.1 * jax.random.normal(sub, (dout, din), dtype=jnp.float32)
        b = jnp.zeros((dout, 1), dtype=jnp.float32)
        params.append((w, b))
    return params, layer_acts


# -------------------------------- wrapper ------------------------------------
def _choose_batch_tiling(batch, target_tile):
    """Pick (padded_batch, tile).  Tile is always a multiple of 128 (lane-dense
    loads/stores); batch is zero-padded up to a multiple of the tile."""
    target_tile = max(_LANE, (target_tile // _LANE) * _LANE)
    padded = pl.cdiv(batch, _LANE) * _LANE
    if padded <= target_tile:
        # Small batch: split into two equal lane-aligned tiles when possible so
        # both v7x TensorCores get work; otherwise one tile.
        if padded >= 2 * _LANE and (padded // 2) % _LANE == 0:
            return padded, padded // 2
        return padded, padded
    padded = pl.cdiv(batch, target_tile) * target_tile
    return padded, target_tile


def hnn_forward(t, x, params, layer_acts, *, target_batch_tile=512):
    """Pallas HNN forward: dh @ J.T with dh = d[sum(mlp(sin(x)))]/dx.

    x: (B, c_in).  `t` is accepted (and ignored) to mirror HNN.forward(t, x).
    """
    del t  # unused, exactly like the PyTorch forward
    x = jnp.asarray(x).astype(jnp.float32)
    batch, c_in = x.shape
    hidden_acts = tuple(layer_acts[:-1])
    hidden_params = params[:-1]
    w_last = params[-1][0]                       # (1, E)

    # Batch-in-lanes layout: transpose once here, zero-pad to a tile multiple.
    padded_b, tile = _choose_batch_tiling(batch, target_batch_tile)
    x_t = x.T                                    # (c_in, B)
    if padded_b != batch:
        x_t = jnp.pad(x_t, ((0, 0), (0, padded_b - batch)))
    grid = padded_b // tile

    flat_params = []
    for (w, b) in hidden_params:
        flat_params.extend([w, b])
    # Backward seed: d(sum H)/d(last-Linear input) = column sums of its weight.
    g_seed = jnp.sum(w_last, axis=0)[:, None]    # (E, 1)
    flat_params.append(g_seed)

    kernel = functools.partial(_hnn_grad_kernel, hidden_acts=hidden_acts)

    in_specs = [pl.BlockSpec((c_in, tile), lambda i: (0, i))]
    # Params are tiny; constant index_map means the pipeline never re-fetches.
    for p in flat_params:
        in_specs.append(pl.BlockSpec(p.shape, lambda i: (0, 0)))

    # Advisory cost estimate (fwd + bwd matmuls, transcendentals, HBM bytes).
    hid = w_last.shape[1]
    mm_flops = sum(4 * w.shape[0] * w.shape[1] for (w, _) in hidden_params)
    cost = pl.CostEstimate(
        flops=int(padded_b) * int(mm_flops),
        transcendentals=int(padded_b) * int(2 * c_in + 2 * hid * len(hidden_params)),
        bytes_accessed=int(2 * padded_b * c_in * 4
                           + sum(int(p.size) * 4 for p in flat_params)),
    )

    out_t = pl.pallas_call(
        kernel,
        out_shape=jax.ShapeDtypeStruct((c_in, padded_b), jnp.float32),
        grid_spec=pltpu.PrefetchScalarGridSpec(
            num_scalar_prefetch=0,
            grid=(grid,),
            in_specs=in_specs,
            out_specs=pl.BlockSpec((c_in, tile), lambda i: (0, i)),
        ),
        compiler_params=pltpu.CompilerParams(
            dimension_semantics=("parallel",)),
        cost_estimate=cost,
    )(x_t, *flat_params)

    return out_t[:, :batch].T                    # back to (B, c_in)


# ------------------------------- reference -----------------------------------
def hnn_reference(t, x, params, layer_acts):
    """Pure-JAX reference using real autodiff (jax.grad), like torch.autograd."""
    del t
    x = jnp.asarray(x).astype(jnp.float32)
    c_in = x.shape[1]

    def h_total(xx):
        h = jnp.sin(1.0 * xx)                    # entry Sin
        for (w, b), act in zip(params, layer_acts):
            h = h @ w.T + b[:, 0]
            h = _act(act, h)
        return jnp.sum(h)                        # sum over batch & output dim

    dh = jax.grad(h_total)(x)                    # (B, c_in)
    half = c_in // 2
    return jnp.concatenate([dh[:, half:], -dh[:, :half]], axis=-1)


if __name__ == "__main__":
    # Small shapes consistent with the module:
    # HNN(c_in=4, E_hid=32, acts=['tanh','sin','relu'])  ->  mlp(4, 32, 1, acts)
    c_in, e_hid = 4, 32
    acts = ["tanh", "sin", "relu"]               # acts[-1] unused (as in PyTorch)

    key = jax.random.PRNGKey(0)
    key, pkey, xkey, x2key = jax.random.split(key, 4)

    params, layer_acts = init_hnn_params(pkey, c_in, e_hid, acts)
    t = jnp.zeros(())                            # unused time arg of forward(t, x)

    # Case 1: small batch -> single lane-aligned tile.
    batch = 16
    x = jax.random.normal(xkey, (batch, c_in), dtype=jnp.float32)
    out = jax.block_until_ready(hnn_forward(t, x, params, layer_acts))
    ref = hnn_reference(t, x, params, layer_acts)
    assert out.shape == (batch, c_in)
    assert jnp.allclose(out, ref, atol=1e-4, rtol=1e-3), "mismatch vs autodiff ref"

    # Case 2: non-divisible batch exercising padding + a 2-step parallel grid.
    batch2 = 200
    x2 = jax.random.normal(x2key, (batch2, c_in), dtype=jnp.float32)
    out2 = jax.block_until_ready(
        hnn_forward(t, x2, params, layer_acts, target_batch_tile=128))
    ref2 = hnn_reference(t, x2, params, layer_acts)
    assert out2.shape == (batch2, c_in)
    assert jnp.allclose(out2, ref2, atol=1e-4, rtol=1e-3), "mismatch vs autodiff ref"

    print("KERNEL_OK")
</pallas_src>

<mosaic_0001>
module attributes {stable_mosaic.version = 11 : i64} {
  func.func @_hnn_grad_kernel(%arg0: i32, %arg1: memref<4x128xf32, #tpu.memory_space<vmem>>, %arg2: memref<32x4xf32, #tpu.memory_space<vmem>>, %arg3: memref<32x1xf32, #tpu.memory_space<vmem>>, %arg4: memref<32x32xf32, #tpu.memory_space<vmem>>, %arg5: memref<32x1xf32, #tpu.memory_space<vmem>>, %arg6: memref<32x1xf32, #tpu.memory_space<vmem>>, %arg7: memref<4x128xf32, #tpu.memory_space<vmem>>) attributes {dimension_semantics = [#tpu.dimension_semantics<parallel>], iteration_bounds = array<i64: 1>, scalar_prefetch = 0 : i64, scratch_operands = 0 : i64, tpu.core_type = #tpu.core_type<tc>, window_params = [{transform_indices = @transform_0, window_bounds = array<i64: 4, 128>}, {pipeline_mode = #tpu.pipeline_mode<synchronous>, transform_indices = @transform_1, window_bounds = array<i64: 32, 4>}, {pipeline_mode = #tpu.pipeline_mode<synchronous>, transform_indices = @transform_2, window_bounds = array<i64: 32, 1>}, {pipeline_mode = #tpu.pipeline_mode<synchronous>, transform_indices = @transform_3, window_bounds = array<i64: 32, 32>}, {pipeline_mode = #tpu.pipeline_mode<synchronous>, transform_indices = @transform_4, window_bounds = array<i64: 32, 1>}, {pipeline_mode = #tpu.pipeline_mode<synchronous>, transform_indices = @transform_5, window_bounds = array<i64: 32, 1>}, {transform_indices = @transform_6, window_bounds = array<i64: 4, 128>}]} {
    %c0 = arith.constant 0 : index
    %c0_0 = arith.constant 0 : index
    %0 = vector.load %arg1[%c0, %c0_0] : memref<4x128xf32, #tpu.memory_space<vmem>>, vector<4x128xf32>
    %cst = arith.constant 1.000000e+00 : f32
    %1 = vector.broadcast %cst : f32 to vector<4x128xf32>
    %2 = arith.mulf %1, %0 : vector<4x128xf32>
    %3 = math.sin %2 : vector<4x128xf32>
    %c0_1 = arith.constant 0 : index
    %c0_2 = arith.constant 0 : index
    %4 = vector.load %arg2[%c0_1, %c0_2] : memref<32x4xf32, #tpu.memory_space<vmem>>, vector<32x4xf32>
    %c0_3 = arith.constant 0 : index
    %c0_4 = arith.constant 0 : index
    %5 = vector.load %arg3[%c0_3, %c0_4] : memref<32x1xf32, #tpu.memory_space<vmem>>, vector<32x1xf32>
    %cst_5 = arith.constant dense<0.000000e+00> : vector<32x128xf32>
    %6 = tpu.matmul %4, %3, %cst_5 {dimension_numbers = #tpu.dot_dimension_numbers<[1], [0], [0], [1], [0, 0, 1, 1], [], []>} : vector<32x4xf32>, vector<4x128xf32>, vector<32x128xf32> -> vector<32x128xf32>
    %7 = vector.broadcast %5 : vector<32x1xf32> to vector<32x128xf32>
    %8 = arith.addf %6, %7 : vector<32x128xf32>
    %9 = math.tanh %8 : vector<32x128xf32>
    %c0_6 = arith.constant 0 : index
    %c0_7 = arith.constant 0 : index
    %10 = vector.load %arg4[%c0_6, %c0_7] : memref<32x32xf32, #tpu.memory_space<vmem>>, vector<32x32xf32>
    %c0_8 = arith.constant 0 : index
    %c0_9 = arith.constant 0 : index
    %11 = vector.load %arg5[%c0_8, %c0_9] : memref<32x1xf32, #tpu.memory_space<vmem>>, vector<32x1xf32>
    %cst_10 = arith.constant dense<0.000000e+00> : vector<32x128xf32>
    %12 = tpu.matmul %10, %9, %cst_10 {dimension_numbers = #tpu.dot_dimension_numbers<[1], [0], [0], [1], [0, 0, 1, 1], [], []>} : vector<32x32xf32>, vector<32x128xf32>, vector<32x128xf32> -> vector<32x128xf32>
    %13 = vector.broadcast %11 : vector<32x1xf32> to vector<32x128xf32>
    %14 = arith.addf %12, %13 : vector<32x128xf32>
    %c0_11 = arith.constant 0 : index
    %c0_12 = arith.constant 0 : index
    %15 = vector.load %arg6[%c0_11, %c0_12] : memref<32x1xf32, #tpu.memory_space<vmem>>, vector<32x1xf32>
    %16 = vector.shape_cast %15 : vector<32x1xf32> to vector<32x1xf32>
    %17 = vector.broadcast %16 : vector<32x1xf32> to vector<32x128xf32>
    %cst_13 = arith.constant 1.000000e+00 : f32
    %18 = vector.broadcast %cst_13 : f32 to vector<32x128xf32>
    %19 = arith.mulf %18, %14 : vector<32x128xf32>
    %20 = math.cos %19 : vector<32x128xf32>
    %21 = arith.mulf %17, %20 : vector<32x128xf32>
    %c0_14 = arith.constant 0 : index
    %c0_15 = arith.constant 0 : index
    %22 = vector.load %arg4[%c0_14, %c0_15] : memref<32x32xf32, #tpu.memory_space<vmem>>, vector<32x32xf32>
    %cst_16 = arith.constant dense<0.000000e+00> : vector<32x128xf32>
    %23 = tpu.matmul %22, %21, %cst_16 {dimension_numbers = #tpu.dot_dimension_numbers<[0], [0], [1], [1], [0, 1, 1, 1], [], []>} : vector<32x32xf32>, vector<32x128xf32>, vector<32x128xf32> -> vector<32x128xf32>
    %24 = math.tanh %8 : vector<32x128xf32>
    %25 = arith.mulf %24, %24 : vector<32x128xf32>
    %cst_17 = arith.constant 1.000000e+00 : f32
    %26 = vector.broadcast %cst_17 : f32 to vector<32x128xf32>
    %27 = arith.subf %26, %25 : vector<32x128xf32>
    %28 = arith.mulf %23, %27 : vector<32x128xf32>
    %c0_18 = arith.constant 0 : index
    %c0_19 = arith.constant 0 : index
    %29 = vector.load %arg2[%c0_18, %c0_19] : memref<32x4xf32, #tpu.memory_space<vmem>>, vector<32x4xf32>
    %cst_20 = arith.constant dense<0.000000e+00> : vector<4x128xf32>
    %30 = tpu.matmul %29, %28, %cst_20 {dimension_numbers = #tpu.dot_dimension_numbers<[0], [0], [1], [1], [0, 1, 1, 1], [], []>} : vector<32x4xf32>, vector<32x128xf32>, vector<4x128xf32> -> vector<4x128xf32>
    %cst_21 = arith.constant 1.000000e+00 : f32
    %31 = vector.broadcast %cst_21 : f32 to vector<4x128xf32>
    %32 = arith.mulf %31, %0 : vector<4x128xf32>
    %33 = math.cos %32 : vector<4x128xf32>
    %34 = arith.mulf %30, %33 : vector<4x128xf32>
    %35 = vector.extract_strided_slice %34 {offsets = [2, 0], sizes = [2, 128], strides = [1, 1]} : vector<4x128xf32> to vector<2x128xf32>
    %c0_22 = arith.constant 0 : index
    %c0_23 = arith.constant 0 : index
    %36 = vector.load %arg7[%c0_22, %c0_23] : memref<4x128xf32, #tpu.memory_space<vmem>>, vector<2x128xf32>
    tpu.vector_store %arg7[%c0_22, %c0_23], %35 {strides = array<i32>} : memref<4x128xf32, #tpu.memory_space<vmem>>, vector<2x128xf32>,
    %37 = vector.extract_strided_slice %34 {offsets = [0, 0], sizes = [2, 128], strides = [1, 1]} : vector<4x128xf32> to vector<2x128xf32>
    %cst_24 = arith.constant 0.000000e+00 : f32
    %38 = vector.broadcast %cst_24 : f32 to vector<2x128xf32>
    %39 = arith.subf %38, %37 : vector<2x128xf32>
    %c2 = arith.constant 2 : index
    %c0_25 = arith.constant 0 : index
    %40 = vector.load %arg7[%c2, %c0_25] : memref<4x128xf32, #tpu.memory_space<vmem>>, vector<2x128xf32>
    tpu.vector_store %arg7[%c2, %c0_25], %39 {strides = array<i32>} : memref<4x128xf32, #tpu.memory_space<vmem>>, vector<2x128xf32>,
    return
  }
  func.func @transform_0(%arg0: i32) -> (i32, i32) {
    %c0_i32 = arith.constant 0 : i32
    %c0_i32_0 = arith.constant 0 : i32
    return %c0_i32, %arg0 : i32, i32
  }
  func.func @transform_1(%arg0: i32) -> (i32, i32) {
    %c0_i32 = arith.constant 0 : i32
    %c0_i32_0 = arith.constant 0 : i32
    %c0_i32_1 = arith.constant 0 : i32
    return %c0_i32, %c0_i32_0 : i32, i32
  }
  func.func @transform_2(%arg0: i32) -> (i32, i32) {
    %c0_i32 = arith.constant 0 : i32
    %c0_i32_0 = arith.constant 0 : i32
    %c0_i32_1 = arith.constant 0 : i32
    return %c0_i32, %c0_i32_0 : i32, i32
  }
  func.func @transform_3(%arg0: i32) -> (i32, i32) {
    %c0_i32 = arith.constant 0 : i32
    %c0_i32_0 = arith.constant 0 : i32
    %c0_i32_1 = arith.constant 0 : i32
    return %c0_i32, %c0_i32_0 : i32, i32
  }
  func.func @transform_4(%arg0: i32) -> (i32, i32) {
    %c0_i32 = arith.constant 0 : i32
    %c0_i32_0 = arith.constant 0 : i32
    %c0_i32_1 = arith.constant 0 : i32
    return %c0_i32, %c0_i32_0 : i32, i32
  }
  func.func @transform_5(%arg0: i32) -> (i32, i32) {
    %c0_i32 = arith.constant 0 : i32
    %c0_i32_0 = arith.constant 0 : i32
    %c0_i32_1 = arith.constant 0 : i32
    return %c0_i32, %c0_i32_0 : i32, i32
  }
  func.func @transform_6(%arg0: i32) -> (i32, i32) {
    %c0_i32 = arith.constant 0 : i32
    %c0_i32_0 = arith.constant 0 : i32
    return %c0_i32, %arg0 : i32, i32
  }
}

</mosaic_0001>

<llo_original>
// kernel: tpu_custom_call.1
$region0: #{tpu_custom_call.1}
  #allocation0 [shape = 'u32[]', space=smem, size = 0x4, offset = 0x4, fixed_abs, tag = 'smem constant byte address 0x4 - core index']
  #allocation1 [shape = 'u32[144,128]{1,0:T(1,128)}', space=vmem, size = 0x12000, scoped, tag = 'internal scratch']
  %s0 = inlined_call_operand.vmem [shape: f32[4,128], index: 0, kind: input, shape index: {}]
  %s1 = inlined_call_operand.vmem [shape: f32[32,4], index: 1, kind: input, shape index: {}]
  %s2 = inlined_call_operand.vmem [shape: f32[32,1], index: 2, kind: input, shape index: {}]
  %s3 = inlined_call_operand.vmem [shape: f32[32,32], index: 3, kind: input, shape index: {}]
  %s4 = inlined_call_operand.vmem [shape: f32[32,1], index: 4, kind: input, shape index: {}]
  %s5 = inlined_call_operand.vmem [shape: f32[32,1], index: 5, kind: input, shape index: {}]
  %s6 = inlined_call_operand.hbm [shape: f32[4,128], index: 6, kind: output, shape index: {}]
  %s7 = sld [smem:[#allocation0]]
  $region34: #{tpu_custom_call.1} parent=0
    _
  %s9 = ssub.s32 1, %s7
  %s10 = scalar_select 0, %s9, %s7
  $region1: #{tpu_custom_call.1} parent=0
    #allocation2 [shape = 'u8[2048]{0}', space=vmem, size = 0x800, scoped, tag = 'output window, operand 0, single buffered']
    #allocation3 [shape = 's32[1]{0}', space=sflag, size = 0x4, scoped, tag = 'scoped memory for tpu_custom_call.1']
    %11 = vsyncpa [#allocation3], 0
    // Predicated region
    $region2: #{tpu_custom_call.1} parent=1 // pred_check
      _
    $region3: #{tpu_custom_call.1} parent=1 // pred_check_branch
      %13 = sbr.rel (0) target = $region5
    $region4: #{tpu_custom_call.1} parent=1 // pred_region
      _
    $region5: #{tpu_custom_call.1} parent=1 // pred_fallthru
      _
    // Predicated region
    $region6: #{tpu_custom_call.1} parent=1 // pred_check
      _
    $region7: #{tpu_custom_call.1} parent=1 // pred_check_branch
      %15 = sbr.rel (0) target = $region9
    $region8: #{tpu_custom_call.1} parent=1 // pred_region
      _
    $region9: #{tpu_custom_call.1} parent=1 // pred_fallthru
      _
    // Predicated region
    $region10: #{tpu_custom_call.1} parent=1 // pred_check
      _
    $region11: #{tpu_custom_call.1} parent=1 // pred_check_branch
      %17 = sbr.rel (0) target = $region13
    $region12: #{tpu_custom_call.1} parent=1 // pred_region
      _
    $region13: #{tpu_custom_call.1} parent=1 // pred_fallthru
      _
    // Predicated region
    $region14: #{tpu_custom_call.1} parent=1 // pred_check
      _
    $region15: #{tpu_custom_call.1} parent=1 // pred_check_branch
      %19 = sbr.rel (0) target = $region17
    $region16: #{tpu_custom_call.1} parent=1 // pred_region
      _
    $region17: #{tpu_custom_call.1} parent=1 // pred_fallthru
      _
    // Predicated region
    $region18: #{tpu_custom_call.1} parent=1 // pred_check
      _
    $region19: #{tpu_custom_call.1} parent=1 // pred_check_branch
      %21 = sbr.rel (0) target = $region21
    $region20: #{tpu_custom_call.1} parent=1 // pred_region
      _
    $region21: #{tpu_custom_call.1} parent=1 // pred_fallthru
      _
    // Predicated region
    $region22: #{tpu_custom_call.1} parent=1 // pred_check
      _
    $region23: #{tpu_custom_call.1} parent=1 // pred_check_branch
      %23 = sbr.rel (0) target = $region25
    $region24: #{tpu_custom_call.1} parent=1 // pred_region
      _
    $region25: #{tpu_custom_call.1} parent=1 // pred_fallthru
      _
    %v24 = vld [vmem:[%s0] sm:$0xf]
    %v25 = vand.u32 2147483647, %v24
    %vm26 = vcmp.le.f32.partialorder %v25, 0.7853982
    %vm27 = vcmp.lt.s32.totalorder %v24, 0
    %v28 = vand.u32 %v24, 2139095040
    %v29 = vshrl.u32 %v28, 23
    %v30 = vsub.s32 %v29, 127
    %v31 = vand.u32 2147483647, %v24
    %v32 = vand.u32 %v31, 8388607
    %v33 = vor.u32 %v32, 8388608
    %v34 = vsub.s32 0, %v33
    %v35 = vadd.s32 %v30, 1
    %vm36 = vcmp.gt.s32.totalorder %v35, 0
    %v37 = vsel %vm36, %v35, 0
    %v38 = vshrl.u32 %v37, 5
    %v39 = vand.u32 %v37, 31
    %v40 = vsub.s32 32, %v39
    %v41 = vshrl.u32 683565275, %v40
    %v42 = vshll.u32 683565275, %v39
    %v43 = vshrl.u32 2475754826, %v40
    %v44 = vor.u32 %v42, %v43
    %v45 = vshll.u32 2475754826, %v39
    %v46 = vshrl.u32 2131351028, %v40
    %v47 = vor.u32 %v45, %v46
    %v48 = vshll.u32 2131351028, %v39
    %v49 = vshrl.u32 2102212464, %v40
    %v50 = vor.u32 %v48, %v49
    %v51 = vshll.u32 2102212464, %v39
    %v52 = vshrl.u32 920167782, %v40
    %v53 = vor.u32 %v51, %v52
    %v54 = vshll.u32 920167782, %v39
    %v55 = vshrl.u32 1326507024, %v40
    %v56 = vor.u32 %v54, %v55
    %vm57 = vcmp.lt.s32.totalorder %v38, 1
    %vm58 = vcmp.lt.s32.totalorder %v38, 2
    %vm59 = vcmp.lt.s32.totalorder %v38, 3
    %vm60 = vcmp.lt.s32.totalorder %v38, 4
    %v61 = vsel %vm57, %v41, %v44
    %v62 = vsel %vm60, %v50, 2102212464
    %v63 = vsel %vm59, %v47, %v62
    %v64 = vsel %vm58, %v61, %v63
    %v65 = vsel %vm57, %v44, %v47
    %v66 = vsel %vm60, %v53, 920167782
    %v67 = vsel %vm59, %v50, %v66
    %v68 = vsel %vm58, %v65, %v67
    %v69 = vsel %vm57, %v47, %v50
    %v70 = vsel %vm60, %v56, 1326507024
    %v71 = vsel %vm59, %v53, %v70
    %v72 = vsel %vm58, %v69, %v71
    %v73 = vshll.u32 %v33, 8
    %v74 = vmul.u32.u64.compose %v73, %v72
    %v75 = vextract.low.u32 %v74
    %v76 = vextract.high.u32 %v74
    %v77 = vmul.u32.u64.compose %v73, %v68
    %v78 = vextract.low.u32 %v77
    %v79 = vextract.high.u32 %v77
    %v80 = vmul.u32 %v73, %v64
    %v81 = vadd.s32 %v76, %v78
    %vm82 = vc.u32 %v76, %v78
    %v83 = vadd.s32 %v79, 1
    %v84 = vsel %vm82, %v83, %v79
    %v85 = vadd.s32 %v80, %v84
    %v86 = vadd.s32 %v85, 536870912
    %v87 = vshrl.u32 %v86, 30
    %v88 = vshll.u32 %v87, 30
    %v89 = vsub.s32 %v85, %v88
    %vm90 = vcmp.lt.s32.totalorder %v89, 0
    %v91 = vsub.s32 0, %v89
    %v92 = vsel %vm90, %v91, %v89
    %v93 = vclz %v92
    %v94 = vsub.s32 %v93, 2
    %vm95 = vcmp.gt.s32.totalorder 0, %v94
    %v96 = vsel %vm95, 0, %v94
    %v97 = vsub.s32 32, %v96
    %v98 = vshll.u32 %v89, %v96
    %v99 = vshrl.u32 %v81, %v97
    %v100 = vor.u32 %v98, %v99
    %v101 = vsub.s32 4294967266, %v96
    %v102 = vadd.s32 %v101, 127
    %v103 = vshll.u32 %v102, 23
    %v104 = vor.u32 4788187, %v103
    %v105 = vand.u32 2147483647, %v104
    %v107 = vcvt.s32.f32 %v100
    %v108 = vmul.f32 %v107, %v105
    %v109 = vxor.u32 %v108, 2147483648
    %v110 = vsel %vm27, %v109, %v108
    %v111 = vsub.s32 4, %v87
    %v112 = vsel %vm27, %v111, %v87
    %v113 = vsel %vm26, %v24, %v110
    %v114 = vsel %vm26, 0, %v112
    %v115 = vcosq.f32.pop %v113
    %v116 = vsinq.f32.pop %v113
    %vm117 = vweird.f32 %v24
    %v118 = vadd.s32 %v114, 3
    %v119 = vand.u32 %v118, 3
    %vm120 = vcmp.lt.s32.totalorder %v119, 2
    %vm121 = vcmp.eq.s32.totalorder %v119, 0
    %v122 = vxor.u32 %v116, 2147483648
    %v123 = vsel %vm121, %v115, %v122
    %vm124 = vcmp.eq.s32.totalorder %v119, 2
    %v125 = vxor.u32 %v115, 2147483648
    %v126 = vsel %vm124, %v125, %v116
    %v127 = vsel %vm120, %v123, %v126
    %v128 = vsel %vm117, nan, %v127
    %v129 = vld [vmem:[%s1] sm:$0xff]
    %v130 = vld [vmem:[%s1 + $0x8] sm:$0xff]
    %v131 = vld [vmem:[%s1 + $0x10] sm:$0xff]
    %v132 = vld [vmem:[%s1 + $0x18] sm:$0xff]
    %v133 = vld [vmem:[%s2] sm:$0xff]
    %v134 = vld [vmem:[%s2 + $0x8] sm:$0xff]
    %v135 = vld [vmem:[%s2 + $0x10] sm:$0xff]
    %v136 = vld [vmem:[%s2 + $0x18] sm:$0xff]
    %138 = vset.pattern.permute.xlu0 0
    %139 = vperm.xlu0 %138, %v133
    %v140 = vpop.permute.xlu0 %139
    %143 = vset.pattern.permute.xlu0 0
    %144 = vperm.xlu0 %143, %v134
    %v145 = vpop.permute.xlu0 %144
    %148 = vset.pattern.permute.xlu0 0
    %149 = vperm.xlu0 %148, %v135
    %v150 = vpop.permute.xlu0 %149
    %153 = vset.pattern.permute.xlu0 0
    %154 = vperm.xlu0 %153, %v136
    %v155 = vpop.permute.xlu0 %154
    %vm157 = vcmask 31744
    %v159 = vsel %vm157, %v129, 0
    %v162 = vsel %vm157, %v130, 0
    %v165 = vsel %vm157, %v131, 0
    %v168 = vsel %vm157, %v132, 0
    %vm170 = vcmask 1043456
    %v172 = vsel %vm170, %v128, 0
    %174 = vmatprep.subr.mxu0 0.0
    %175 = vmatpush1.msra.mxu0 %v172
    %176 = vmatprep.subr.mxu0 0.0
    %177 = vmatpush1.msra.mxu0 0.0
    %178 = vmatprep.subr.mxu0 0.0
    %179 = vmatpush1.msra.mxu0 0.0
    %180 = vmatprep.subr.mxu0 0.0
    %181 = vmatpush1.msra.mxu0 0.0
    %182 = vmatprep.subr.mxu0 0.0
    %183 = vmatpush1.msra.mxu0 0.0
    %184 = vmatprep.subr.mxu0 0.0
    %185 = vmatpush1.msra.mxu0 0.0
    %186 = vmatprep.subr.mxu0 0.0
    %187 = vmatpush1.msra.mxu0 0.0
    %188 = vmatprep.subr.mxu0 0.0
    %189 = vmatpush1.msra.mxu0 0.0
    %190 = vmatprep.subr.mxu0 0.0
    %191 = vmatpush1.msra.mxu0 0.0
    %192 = vmatprep.subr.mxu0 0.0
    %193 = vmatpush1.msra.mxu0 0.0
    %194 = vmatprep.subr.mxu0 0.0
    %195 = vmatpush1.msra.mxu0 0.0
    %196 = vmatprep.subr.mxu0 0.0
    %197 = vmatpush1.msra.mxu0 0.0
    %198 = vmatprep.subr.mxu0 0.0
    %199 = vmatpush1.msra.mxu0 0.0
    %200 = vmatprep.subr.mxu0 0.0
    %201 = vmatpush1.msra.mxu0 0.0
    %202 = vmatprep.subr.mxu0 0.0
    %203 = vmatpush1.msra.mxu0 0.0
    %204 = vmatprep.subr.mxu0 0.0
    %205 = vmatpush1.msra.mxu0 0.0
    %206 = vmatprep.subr.mxu0 0.0
    %207 = vmatpush1.msra.mxu0 0.0
    %208 = vmatprep.subr.mxu0 0.0
    %209 = vmatpush1.msra.mxu0 0.0
    %210 = vmatprep.subr.mxu0 0.0
    %211 = vmatpush1.msra.mxu0 0.0
    %212 = vmatprep.subr.mxu0 0.0
    %213 = vmatpush1.msra.mxu0 0.0
    %214 = vmatprep.subr.mxu0 0.0
    %215 = vmatpush1.msra.mxu0 0.0
    %216 = vmatprep.subr.mxu0 0.0
    %217 = vmatpush1.msra.mxu0 0.0
    %218 = vmatprep.subr.mxu0 0.0
    %219 = vmatpush1.msra.mxu0 0.0
    %220 = vmatprep.subr.mxu0 0.0
    %221 = vmatpush1.msra.mxu0 0.0
    %222 = vmatprep.subr.mxu0 0.0
    %223 = vmatpush1.msra.mxu0 0.0
    %224 = vmatprep.subr.mxu0 0.0
    %225 = vmatpush1.msra.mxu0 0.0
    %226 = vmatprep.subr.mxu0 0.0
    %227 = vmatpush1.msra.mxu0 0.0
    %228 = vmatprep.subr.mxu0 0.0
    %229 = vmatpush1.msra.mxu0 0.0
    %230 = vmatprep.subr.mxu0 0.0
    %231 = vmatpush1.msra.mxu0 0.0
    %232 = vmatprep.subr.mxu0 0.0
    %233 = vmatpush1.msra.mxu0 0.0
    %234 = vmatprep.subr.mxu0 0.0
    %235 = vmatpush1.msra.mxu0 0.0
    %236 = vmatprep.subr.mxu0 0.0
    %237 = vmatpush1.msra.mxu0 0.0
    %238 = vmatprep.mubr.f32.mxu0 0.0
    %239 = vmatmul.mubr.f32.gmra.mrb[0].mxu0 %v159
    %v240 = vpop.f32.mrb[0].mxu0
    %v241 = vadd.f32 %v140, %v240
    %v242 = vpop.f32.mrb[0].mxu0
    %243 = vmatprep.mubr.f32.mxu0 0.0
    %244 = vmatmul.mubr.f32.gmra.mrb[0].mxu0 %v162
    %v245 = vpop.f32.mrb[0].mxu0
    %v246 = vadd.f32 %v145, %v245
    %v247 = vpop.f32.mrb[0].mxu0
    %248 = vmatprep.mubr.f32.mxu0 0.0
    %249 = vmatmul.mubr.f32.gmra.mrb[0].mxu0 %v165
    %v250 = vpop.f32.mrb[0].mxu0
    %v251 = vadd.f32 %v150, %v250
    %v252 = vpop.f32.mrb[0].mxu0
    %253 = vmatprep.mubr.f32.mxu0 0.0
    %254 = vmatmul.mubr.f32.gmra.mrb[0].mxu0 %v168
    %v255 = vpop.f32.mrb[0].mxu0
    %v256 = vadd.f32 %v155, %v255
    %v257 = vpop.f32.mrb[0].mxu0
    %258 = vdwg.mxu0
    %v259 = vtanh.pop %v241
    %v260 = vtanh.pop %v246
    %v261 = vtanh.pop %v251
    %v262 = vtanh.pop %v256
    %v263 = vld [vmem:[%s3] sm:$0xff]
    %v264 = vld [vmem:[%s3 + $0x8] sm:$0xff]
    %v265 = vld [vmem:[%s3 + $0x10] sm:$0xff]
    %v266 = vld [vmem:[%s3 + $0x18] sm:$0xff]
    %v267 = vld [vmem:[%s4] sm:$0xff]
    %v268 = vld [vmem:[%s4 + $0x8] sm:$0xff]
    %v269 = vld [vmem:[%s4 + $0x10] sm:$0xff]
    %v270 = vld [vmem:[%s4 + $0x18] sm:$0xff]
    %272 = vset.pattern.permute.xlu0 0
    %273 = vperm.xlu0 %272, %v267
    %v274 = vpop.permute.xlu0 %273
    %277 = vset.pattern.permute.xlu0 0
    %278 = vperm.xlu0 %277, %v268
    %v279 = vpop.permute.xlu0 %278
    %282 = vset.pattern.permute.xlu0 0
    %283 = vperm.xlu0 %282, %v269
    %v284 = vpop.permute.xlu0 %283
    %287 = vset.pattern.permute.xlu0 0
    %288 = vperm.xlu0 %287, %v270
    %v289 = vpop.permute.xlu0 %288
    %vm291 = vcmask 261120
    %v293 = vsel %vm291, %v263, 0
    %v296 = vsel %vm291, %v264, 0
    %v299 = vsel %vm291, %v265, 0
    %v302 = vsel %vm291, %v266, 0
    %304 = vmatprep.subr.mxu0 0.0
    %305 = vmatpush1.msra.mxu0 %v259
    %306 = vmatprep.subr.mxu0 0.0
    %307 = vmatpush1.msra.mxu0 %v260
    %308 = vmatprep.subr.mxu0 0.0
    %309 = vmatpush1.msra.mxu0 %v261
    %310 = vmatprep.subr.mxu0 0.0
    %311 = vmatpush1.msra.mxu0 %v262
    %312 = vmatprep.subr.mxu0 0.0
    %313 = vmatpush1.msra.mxu0 0.0
    %314 = vmatprep.subr.mxu0 0.0
    %315 = vmatpush1.msra.mxu0 0.0
    %316 = vmatprep.subr.mxu0 0.0
    %317 = vmatpush1.msra.mxu0 0.0
    %318 = vmatprep.subr.mxu0 0.0
    %319 = vmatpush1.msra.mxu0 0.0
    %320 = vmatprep.subr.mxu0 0.0
    %321 = vmatpush1.msra.mxu0 0.0
    %322 = vmatprep.subr.mxu0 0.0
    %323 = vmatpush1.msra.mxu0 0.0
    %324 = vmatprep.subr.mxu0 0.0
    %325 = vmatpush1.msra.mxu0 0.0
    %326 = vmatprep.subr.mxu0 0.0
    %327 = vmatpush1.msra.mxu0 0.0
    %328 = vmatprep.subr.mxu0 0.0
    %329 = vmatpush1.msra.mxu0 0.0
    %330 = vmatprep.subr.mxu0 0.0
    %331 = vmatpush1.msra.mxu0 0.0
    %332 = vmatprep.subr.mxu0 0.0
    %333 = vmatpush1.msra.mxu0 0.0
    %334 = vmatprep.subr.mxu0 0.0
    %335 = vmatpush1.msra.mxu0 0.0
    %336 = vmatprep.subr.mxu0 0.0
    %337 = vmatpush1.msra.mxu0 0.0
    %338 = vmatprep.subr.mxu0 0.0
    %339 = vmatpush1.msra.mxu0 0.0
    %340 = vmatprep.subr.mxu0 0.0
    %341 = vmatpush1.msra.mxu0 0.0
    %342 = vmatprep.subr.mxu0 0.0
    %343 = vmatpush1.msra.mxu0 0.0
    %344 = vmatprep.subr.mxu0 0.0
    %345 = vmatpush1.msra.mxu0 0.0
    %346 = vmatprep.subr.mxu0 0.0
    %347 = vmatpush1.msra.mxu0 0.0
    %348 = vmatprep.subr.mxu0 0.0
    %349 = vmatpush1.msra.mxu0 0.0
    %350 = vmatprep.subr.mxu0 0.0
    %351 = vmatpush1.msra.mxu0 0.0
    %352 = vmatprep.subr.mxu0 0.0
    %353 = vmatpush1.msra.mxu0 0.0
    %354 = vmatprep.subr.mxu0 0.0
    %355 = vmatpush1.msra.mxu0 0.0
    %356 = vmatprep.subr.mxu0 0.0
    %357 = vmatpush1.msra.mxu0 0.0
    %358 = vmatprep.subr.mxu0 0.0
    %359 = vmatpush1.msra.mxu0 0.0
    %360 = vmatprep.subr.mxu0 0.0
    %361 = vmatpush1.msra.mxu0 0.0
    %362 = vmatprep.subr.mxu0 0.0
    %363 = vmatpush1.msra.mxu0 0.0
    %364 = vmatprep.subr.mxu0 0.0
    %365 = vmatpush1.msra.mxu0 0.0
    %366 = vmatprep.subr.mxu0 0.0
    %367 = vmatpush1.msra.mxu0 0.0
    %368 = vmatprep.mubr.f32.mxu0 0.0
    %369 = vmatmul.mubr.f32.gmra.mrb[0].mxu0 %v293
    %v370 = vpop.f32.mrb[0].mxu0
    %v371 = vadd.f32 %v274, %v370
    %v372 = vpop.f32.mrb[0].mxu0
    %373 = vmatprep.mubr.f32.mxu0 0.0
    %374 = vmatmul.mubr.f32.gmra.mrb[0].mxu0 %v296
    %v375 = vpop.f32.mrb[0].mxu0
    %v376 = vadd.f32 %v279, %v375
    %v377 = vpop.f32.mrb[0].mxu0
    %378 = vmatprep.mubr.f32.mxu0 0.0
    %379 = vmatmul.mubr.f32.gmra.mrb[0].mxu0 %v299
    %v380 = vpop.f32.mrb[0].mxu0
    %v381 = vadd.f32 %v284, %v380
    %v382 = vpop.f32.mrb[0].mxu0
    %383 = vmatprep.mubr.f32.mxu0 0.0
    %384 = vmatmul.mubr.f32.gmra.mrb[0].mxu0 %v302
    %v385 = vpop.f32.mrb[0].mxu0
    %v386 = vadd.f32 %v289, %v385
    %v387 = vpop.f32.mrb[0].mxu0
    %388 = vdwg.mxu0
    %v389 = vld [vmem:[%s5] sm:$0xff]
    %v390 = vld [vmem:[%s5 + $0x8] sm:$0xff]
    %v391 = vld [vmem:[%s5 + $0x10] sm:$0xff]
    %v392 = vld [vmem:[%s5 + $0x18] sm:$0xff]
    %394 = vset.pattern.permute.xlu0 0
    %395 = vperm.xlu0 %394, %v389
    %v396 = vpop.permute.xlu0 %395
    %399 = vset.pattern.permute.xlu0 0
    %400 = vperm.xlu0 %399, %v390
    %v401 = vpop.permute.xlu0 %400
    %404 = vset.pattern.permute.xlu0 0
    %405 = vperm.xlu0 %404, %v391
    %v406 = vpop.permute.xlu0 %405
    %409 = vset.pattern.permute.xlu0 0
    %410 = vperm.xlu0 %409, %v392
    %v411 = vpop.permute.xlu0 %410
    %v413 = vand.u32 2147483647, %v371
    %vm414 = vcmp.le.f32.partialorder %v413, 0.7853982
    %vm415 = vcmp.lt.s32.totalorder %v371, 0
    %v416 = vand.u32 %v371, 2139095040
    %v417 = vshrl.u32 %v416, 23
    %v418 = vsub.s32 %v417, 127
    %v419 = vand.u32 2147483647, %v371
    %v420 = vand.u32 %v419, 8388607
    %v421 = vor.u32 %v420, 8388608
    %v422 = vsub.s32 0, %v421
    %v423 = vadd.s32 %v418, 1
    %vm424 = vcmp.gt.s32.totalorder %v423, 0
    %v425 = vsel %vm424, %v423, 0
    %v426 = vshrl.u32 %v425, 5
    %v427 = vand.u32 %v425, 31
    %v428 = vsub.s32 32, %v427
    %v429 = vshrl.u32 683565275, %v428
    %v430 = vshll.u32 683565275, %v427
    %v431 = vshrl.u32 2475754826, %v428
    %v432 = vor.u32 %v430, %v431
    %v433 = vshll.u32 2475754826, %v427
    %v434 = vshrl.u32 2131351028, %v428
    %v435 = vor.u32 %v433, %v434
    %v436 = vshll.u32 2131351028, %v427
    %v437 = vshrl.u32 2102212464, %v428
    %v438 = vor.u32 %v436, %v437
    %v439 = vshll.u32 2102212464, %v427
    %v440 = vshrl.u32 920167782, %v428
    %v441 = vor.u32 %v439, %v440
    %v442 = vshll.u32 920167782, %v427
    %v443 = vshrl.u32 1326507024, %v428
    %v444 = vor.u32 %v442, %v443
    %vm445 = vcmp.lt.s32.totalorder %v426, 1
    %vm446 = vcmp.lt.s32.totalorder %v426, 2
    %vm447 = vcmp.lt.s32.totalorder %v426, 3
    %vm448 = vcmp.lt.s32.totalorder %v426, 4
    %v449 = vsel %vm445, %v429, %v432
    %v450 = vsel %vm448, %v438, 2102212464
    %v451 = vsel %vm447, %v435, %v450
    %v452 = vsel %vm446, %v449, %v451
    %v453 = vsel %vm445, %v432, %v435
    %v454 = vsel %vm448, %v441, 920167782
    %v455 = vsel %vm447, %v438, %v454
    %v456 = vsel %vm446, %v453, %v455
    %v457 = vsel %vm445, %v435, %v438
    %v458 = vsel %vm448, %v444, 1326507024
    %v459 = vsel %vm447, %v441, %v458
    %v460 = vsel %vm446, %v457, %v459
    %v461 = vshll.u32 %v421, 8
    %v462 = vmul.u32.u64.compose %v461, %v460
    %v463 = vextract.low.u32 %v462
    %v464 = vextract.high.u32 %v462
    %v465 = vmul.u32.u64.compose %v461, %v456
    %v466 = vextract.low.u32 %v465
    %v467 = vextract.high.u32 %v465
    %v468 = vmul.u32 %v461, %v452
    %v469 = vadd.s32 %v464, %v466
    %vm470 = vc.u32 %v464, %v466
    %v471 = vadd.s32 %v467, 1
    %v472 = vsel %vm470, %v471, %v467
    %v473 = vadd.s32 %v468, %v472
    %v474 = vadd.s32 %v473, 536870912
    %v475 = vshrl.u32 %v474, 30
    %v476 = vshll.u32 %v475, 30
    %v477 = vsub.s32 %v473, %v476
    %vm478 = vcmp.lt.s32.totalorder %v477, 0
    %v479 = vsub.s32 0, %v477
    %v480 = vsel %vm478, %v479, %v477
    %v481 = vclz %v480
    %v482 = vsub.s32 %v481, 2
    %vm483 = vcmp.gt.s32.totalorder 0, %v482
    %v484 = vsel %vm483, 0, %v482
    %v485 = vsub.s32 32, %v484
    %v486 = vshll.u32 %v477, %v484
    %v487 = vshrl.u32 %v469, %v485
    %v488 = vor.u32 %v486, %v487
    %v489 = vsub.s32 4294967266, %v484
    %v490 = vadd.s32 %v489, 127
    %v491 = vshll.u32 %v490, 23
    %v492 = vor.u32 4788187, %v491
    %v493 = vand.u32 2147483647, %v492
    %v495 = vcvt.s32.f32 %v488
    %v496 = vmul.f32 %v495, %v493
    %v497 = vxor.u32 %v496, 2147483648
    %v498 = vsel %vm415, %v497, %v496
    %v499 = vsub.s32 4, %v475
    %v500 = vsel %vm415, %v499, %v475
    %v501 = vsel %vm414, %v371, %v498
    %v502 = vsel %vm414, 0, %v500
    %v503 = vcosq.f32.pop %v501
    %v504 = vsinq.f32.pop %v501
    %vm505 = vweird.f32 %v371
    %v506 = vand.u32 %v502, 3
    %vm507 = vcmp.lt.s32.totalorder %v506, 2
    %vm508 = vcmp.eq.s32.totalorder %v506, 0
    %v509 = vxor.u32 %v504, 2147483648
    %v510 = vsel %vm508, %v503, %v509
    %vm511 = vcmp.eq.s32.totalorder %v506, 2
    %v512 = vxor.u32 %v503, 2147483648
    %v513 = vsel %vm511, %v512, %v504
    %v514 = vsel %vm507, %v510, %v513
    %v515 = vsel %vm505, nan, %v514
    %v516 = vand.u32 2147483647, %v376
    %vm517 = vcmp.le.f32.partialorder %v516, 0.7853982
    %vm518 = vcmp.lt.s32.totalorder %v376, 0
    %v519 = vand.u32 %v376, 2139095040
    %v520 = vshrl.u32 %v519, 23
    %v521 = vsub.s32 %v520, 127
    %v522 = vand.u32 2147483647, %v376
    %v523 = vand.u32 %v522, 8388607
    %v524 = vor.u32 %v523, 8388608
    %v525 = vsub.s32 0, %v524
    %v526 = vadd.s32 %v521, 1
    %vm527 = vcmp.gt.s32.totalorder %v526, 0
    %v528 = vsel %vm527, %v526, 0
    %v529 = vshrl.u32 %v528, 5
    %v530 = vand.u32 %v528, 31
    %v531 = vsub.s32 32, %v530
    %v532 = vshrl.u32 683565275, %v531
    %v533 = vshll.u32 683565275, %v530
    %v534 = vshrl.u32 2475754826, %v531
    %v535 = vor.u32 %v533, %v534
    %v536 = vshll.u32 2475754826, %v530
    %v537 = vshrl.u32 2131351028, %v531
    %v538 = vor.u32 %v536, %v537
    %v539 = vshll.u32 2131351028, %v530
    %v540 = vshrl.u32 2102212464, %v531
    %v541 = vor.u32 %v539, %v540
    %v542 = vshll.u32 2102212464, %v530
    %v543 = vshrl.u32 920167782, %v531
    %v544 = vor.u32 %v542, %v543
    %v545 = vshll.u32 920167782, %v530
    %v546 = vshrl.u32 1326507024, %v531
    %v547 = vor.u32 %v545, %v546
    %vm548 = vcmp.lt.s32.totalorder %v529, 1
    %vm549 = vcmp.lt.s32.totalorder %v529, 2
    %vm550 = vcmp.lt.s32.totalorder %v529, 3
    %vm551 = vcmp.lt.s32.totalorder %v529, 4
    %v552 = vsel %vm548, %v532, %v535
    %v553 = vsel %vm551, %v541, 2102212464
    %v554 = vsel %vm550, %v538, %v553
    %v555 = vsel %vm549, %v552, %v554
    %v556 = vsel %vm548, %v535, %v538
    %v557 = vsel %vm551, %v544, 920167782
    %v558 = vsel %vm550, %v541, %v557
    %v559 = vsel %vm549, %v556, %v558
    %v560 = vsel %vm548, %v538, %v541
    %v561 = vsel %vm551, %v547, 1326507024
    %v562 = vsel %vm550, %v544, %v561
    %v563 = vsel %vm549, %v560, %v562
    %v564 = vshll.u32 %v524, 8
    %v565 = vmul.u32.u64.compose %v564, %v563
    %v566 = vextract.low.u32 %v565
    %v567 = vextract.high.u32 %v565
    %v568 = vmul.u32.u64.compose %v564, %v559
    %v569 = vextract.low.u32 %v568
    %v570 = vextract.high.u32 %v568
    %v571 = vmul.u32 %v564, %v555
    %v572 = vadd.s32 %v567, %v569
    %vm573 = vc.u32 %v567, %v569
    %v574 = vadd.s32 %v570, 1
    %v575 = vsel %vm573, %v574, %v570
    %v576 = vadd.s32 %v571, %v575
    %v577 = vadd.s32 %v576, 536870912
    %v578 = vshrl.u32 %v577, 30
    %v579 = vshll.u32 %v578, 30
    %v580 = vsub.s32 %v576, %v579
    %vm581 = vcmp.lt.s32.totalorder %v580, 0
    %v582 = vsub.s32 0, %v580
    %v583 = vsel %vm581, %v582, %v580
    %v584 = vclz %v583
    %v585 = vsub.s32 %v584, 2
    %vm586 = vcmp.gt.s32.totalorder 0, %v585
    %v587 = vsel %vm586, 0, %v585
    %v588 = vsub.s32 32, %v587
    %v589 = vshll.u32 %v580, %v587
    %v590 = vshrl.u32 %v572, %v588
    %v591 = vor.u32 %v589, %v590
    %v592 = vsub.s32 4294967266, %v587
    %v593 = vadd.s32 %v592, 127
    %v594 = vshll.u32 %v593, 23
    %v595 = vor.u32 4788187, %v594
    %v596 = vand.u32 2147483647, %v595
    %v598 = vcvt.s32.f32 %v591
    %v599 = vmul.f32 %v598, %v596
    %v600 = vxor.u32 %v599, 2147483648
    %v601 = vsel %vm518, %v600, %v599
    %v602 = vsub.s32 4, %v578
    %v603 = vsel %vm518, %v602, %v578
    %v604 = vsel %vm517, %v376, %v601
    %v605 = vsel %vm517, 0, %v603
    %v606 = vcosq.f32.pop %v604
    %v607 = vsinq.f32.pop %v604
    %vm608 = vweird.f32 %v376
    %v609 = vand.u32 %v605, 3
    %vm610 = vcmp.lt.s32.totalorder %v609, 2
    %vm611 = vcmp.eq.s32.totalorder %v609, 0
    %v612 = vxor.u32 %v607, 2147483648
    %v613 = vsel %vm611, %v606, %v612
    %vm614 = vcmp.eq.s32.totalorder %v609, 2
    %v615 = vxor.u32 %v606, 2147483648
    %v616 = vsel %vm614, %v615, %v607
    %v617 = vsel %vm610, %v613, %v616
    %v618 = vsel %vm608, nan, %v617
    %v619 = vand.u32 2147483647, %v381
    %vm620 = vcmp.le.f32.partialorder %v619, 0.7853982
    %vm621 = vcmp.lt.s32.totalorder %v381, 0
    %v622 = vand.u32 %v381, 2139095040
    %v623 = vshrl.u32 %v622, 23
    %v624 = vsub.s32 %v623, 127
    %v625 = vand.u32 2147483647, %v381
    %v626 = vand.u32 %v625, 8388607
    %v627 = vor.u32 %v626, 8388608
    %v628 = vsub.s32 0, %v627
    %v629 = vadd.s32 %v624, 1
    %vm630 = vcmp.gt.s32.totalorder %v629, 0
    %v631 = vsel %vm630, %v629, 0
    %v632 = vshrl.u32 %v631, 5
    %v633 = vand.u32 %v631, 31
    %v634 = vsub.s32 32, %v633
    %v635 = vshrl.u32 683565275, %v634
    %v636 = vshll.u32 683565275, %v633
    %v637 = vshrl.u32 2475754826, %v634
    %v638 = vor.u32 %v636, %v637
    %v639 = vshll.u32 2475754826, %v633
    %v640 = vshrl.u32 2131351028, %v634
    %v641 = vor.u32 %v639, %v640
    %v642 = vshll.u32 2131351028, %v633
    %v643 = vshrl.u32 2102212464, %v634
    %v644 = vor.u32 %v642, %v643
    %v645 = vshll.u32 2102212464, %v633
    %v646 = vshrl.u32 920167782, %v634
    %v647 = vor.u32 %v645, %v646
    %v648 = vshll.u32 920167782, %v633
    %v649 = vshrl.u32 1326507024, %v634
    %v650 = vor.u32 %v648, %v649
    %vm651 = vcmp.lt.s32.totalorder %v632, 1
    %vm652 = vcmp.lt.s32.totalorder %v632, 2
    %vm653 = vcmp.lt.s32.totalorder %v632, 3
    %vm654 = vcmp.lt.s32.totalorder %v632, 4
    %v655 = vsel %vm651, %v635, %v638
    %v656 = vsel %vm654, %v644, 2102212464
    %v657 = vsel %vm653, %v641, %v656
    %v658 = vsel %vm652, %v655, %v657
    %v659 = vsel %vm651, %v638, %v641
    %v660 = vsel %vm654, %v647, 920167782
    %v661 = vsel %vm653, %v644, %v660
    %v662 = vsel %vm652, %v659, %v661
    %v663 = vsel %vm651, %v641, %v644
    %v664 = vsel %vm654, %v650, 1326507024
    %v665 = vsel %vm653, %v647, %v664
    %v666 = vsel %vm652, %v663, %v665
    %v667 = vshll.u32 %v627, 8
    %v668 = vmul.u32.u64.compose %v667, %v666
    %v669 = vextract.low.u32 %v668
    %v670 = vextract.high.u32 %v668
    %v671 = vmul.u32.u64.compose %v667, %v662
    %v672 = vextract.low.u32 %v671
    %v673 = vextract.high.u32 %v671
    %v674 = vmul.u32 %v667, %v658
    %v675 = vadd.s32 %v670, %v672
    %vm676 = vc.u32 %v670, %v672
    %v677 = vadd.s32 %v673, 1
    %v678 = vsel %vm676, %v677, %v673
    %v679 = vadd.s32 %v674, %v678
    %v680 = vadd.s32 %v679, 536870912
    %v681 = vshrl.u32 %v680, 30
    %v682 = vshll.u32 %v681, 30
    %v683 = vsub.s32 %v679, %v682
    %vm684 = vcmp.lt.s32.totalorder %v683, 0
    %v685 = vsub.s32 0, %v683
    %v686 = vsel %vm684, %v685, %v683
    %v687 = vclz %v686
    %v688 = vsub.s32 %v687, 2
    %vm689 = vcmp.gt.s32.totalorder 0, %v688
    %v690 = vsel %vm689, 0, %v688
    %v691 = vsub.s32 32, %v690
    %v692 = vshll.u32 %v683, %v690
    %v693 = vshrl.u32 %v675, %v691
    %v694 = vor.u32 %v692, %v693
    %v695 = vsub.s32 4294967266, %v690
    %v696 = vadd.s32 %v695, 127
    %v697 = vshll.u32 %v696, 23
    %v698 = vor.u32 4788187, %v697
    %v699 = vand.u32 2147483647, %v698
    %v701 = vcvt.s32.f32 %v694
    %v702 = vmul.f32 %v701, %v699
    %v703 = vxor.u32 %v702, 2147483648
    %v704 = vsel %vm621, %v703, %v702
    %v705 = vsub.s32 4, %v681
    %v706 = vsel %vm621, %v705, %v681
    %v707 = vsel %vm620, %v381, %v704
    %v708 = vsel %vm620, 0, %v706
    %v709 = vcosq.f32.pop %v707
    %v710 = vsinq.f32.pop %v707
    %vm711 = vweird.f32 %v381
    %v712 = vand.u32 %v708, 3
    %vm713 = vcmp.lt.s32.totalorder %v712, 2
    %vm714 = vcmp.eq.s32.totalorder %v712, 0
    %v715 = vxor.u32 %v710, 2147483648
    %v716 = vsel %vm714, %v709, %v715
    %vm717 = vcmp.eq.s32.totalorder %v712, 2
    %v718 = vxor.u32 %v709, 2147483648
    %v719 = vsel %vm717, %v718, %v710
    %v720 = vsel %vm713, %v716, %v719
    %v721 = vsel %vm711, nan, %v720
    %v722 = vand.u32 2147483647, %v386
    %vm723 = vcmp.le.f32.partialorder %v722, 0.7853982
    %vm724 = vcmp.lt.s32.totalorder %v386, 0
    %v725 = vand.u32 %v386, 2139095040
    %v726 = vshrl.u32 %v725, 23
    %v727 = vsub.s32 %v726, 127
    %v728 = vand.u32 2147483647, %v386
    %v729 = vand.u32 %v728, 8388607
    %v730 = vor.u32 %v729, 8388608
    %v731 = vsub.s32 0, %v730
    %v732 = vadd.s32 %v727, 1
    %vm733 = vcmp.gt.s32.totalorder %v732, 0
    %v734 = vsel %vm733, %v732, 0
    %v735 = vshrl.u32 %v734, 5
    %v736 = vand.u32 %v734, 31
    %v737 = vsub.s32 32, %v736
    %v738 = vshrl.u32 683565275, %v737
    %v739 = vshll.u32 683565275, %v736
    %v740 = vshrl.u32 2475754826, %v737
    %v741 = vor.u32 %v739, %v740
    %v742 = vshll.u32 2475754826, %v736
    %v743 = vshrl.u32 2131351028, %v737
    %v744 = vor.u32 %v742, %v743
    %v745 = vshll.u32 2131351028, %v736
    %v746 = vshrl.u32 2102212464, %v737
    %v747 = vor.u32 %v745, %v746
    %v748 = vshll.u32 2102212464, %v736
    %v749 = vshrl.u32 920167782, %v737
    %v750 = vor.u32 %v748, %v749
    %v751 = vshll.u32 920167782, %v736
    %v752 = vshrl.u32 1326507024, %v737
    %v753 = vor.u32 %v751, %v752
    %vm754 = vcmp.lt.s32.totalorder %v735, 1
    %vm755 = vcmp.lt.s32.totalorder %v735, 2
    %vm756 = vcmp.lt.s32.totalorder %v735, 3
    %vm757 = vcmp.lt.s32.totalorder %v735, 4
    %v758 = vsel %vm754, %v738, %v741
    %v759 = vsel %vm757, %v747, 2102212464
    %v760 = vsel %vm756, %v744, %v759
    %v761 = vsel %vm755, %v758, %v760
    %v762 = vsel %vm754, %v741, %v744
    %v763 = vsel %vm757, %v750, 920167782
    %v764 = vsel %vm756, %v747, %v763
    %v765 = vsel %vm755, %v762, %v764
    %v766 = vsel %vm754, %v744, %v747
    %v767 = vsel %vm757, %v753, 1326507024
    %v768 = vsel %vm756, %v750, %v767
    %v769 = vsel %vm755, %v766, %v768
    %v770 = vshll.u32 %v730, 8
    %v771 = vmul.u32.u64.compose %v770, %v769
    %v772 = vextract.low.u32 %v771
    %v773 = vextract.high.u32 %v771
    %v774 = vmul.u32.u64.compose %v770, %v765
    %v775 = vextract.low.u32 %v774
    %v776 = vextract.high.u32 %v774
    %v777 = vmul.u32 %v770, %v761
    %v778 = vadd.s32 %v773, %v775
    %vm779 = vc.u32 %v773, %v775
    %v780 = vadd.s32 %v776, 1
    %v781 = vsel %vm779, %v780, %v776
    %v782 = vadd.s32 %v777, %v781
    %v783 = vadd.s32 %v782, 536870912
    %v784 = vshrl.u32 %v783, 30
    %v785 = vshll.u32 %v784, 30
    %v786 = vsub.s32 %v782, %v785
    %vm787 = vcmp.lt.s32.totalorder %v786, 0
    %v788 = vsub.s32 0, %v786
    %v789 = vsel %vm787, %v788, %v786
    %v790 = vclz %v789
    %v791 = vsub.s32 %v790, 2
    %vm792 = vcmp.gt.s32.totalorder 0, %v791
    %v793 = vsel %vm792, 0, %v791
    %v794 = vsub.s32 32, %v793
    %v795 = vshll.u32 %v786, %v793
    %v796 = vshrl.u32 %v778, %v794
    %v797 = vor.u32 %v795, %v796
    %v798 = vsub.s32 4294967266, %v793
    %v799 = vadd.s32 %v798, 127
    %v800 = vshll.u32 %v799, 23
    %v801 = vor.u32 4788187, %v800
    %v802 = vand.u32 2147483647, %v801
    %v804 = vcvt.s32.f32 %v797
    %v805 = vmul.f32 %v804, %v802
    %v806 = vxor.u32 %v805, 2147483648
    %v807 = vsel %vm724, %v806, %v805
    %v808 = vsub.s32 4, %v784
    %v809 = vsel %vm724, %v808, %v784
    %v810 = vsel %vm723, %v386, %v807
    %v811 = vsel %vm723, 0, %v809
    %v812 = vcosq.f32.pop %v810
    %v813 = vsinq.f32.pop %v810
    %vm814 = vweird.f32 %v386
    %v815 = vand.u32 %v811, 3
    %vm816 = vcmp.lt.s32.totalorder %v815, 2
    %vm817 = vcmp.eq.s32.totalorder %v815, 0
    %v818 = vxor.u32 %v813, 2147483648
    %v819 = vsel %vm817, %v812, %v818
    %vm820 = vcmp.eq.s32.totalorder %v815, 2
    %v821 = vxor.u32 %v812, 2147483648
    %v822 = vsel %vm820, %v821, %v813
    %v823 = vsel %vm816, %v819, %v822
    %v824 = vsel %vm814, nan, %v823
    %v825 = vmul.f32 %v396, %v515
    %v826 = vmul.f32 %v401, %v618
    %v827 = vmul.f32 %v406, %v721
    %v828 = vmul.f32 %v411, %v824
    %829 = vxpose.xlu0.b32.start [1/16] %v263, 128
    %830 = vxpose.xlu0.b32.cont [2/16] %v264, 128
    %831 = vxpose.xlu0.b32.cont [3/16] %v265, 128
    %832 = vxpose.xlu0.b32.cont [4/16] %v266, 128
    %833 = vxpose.xlu0.b32.cont [5/16] 0.0, 128
    %834 = vxpose.xlu0.b32.cont [6/16] 0.0, 128
    %835 = vxpose.xlu0.b32.cont [7/16] 0.0, 128
    %836 = vxpose.xlu0.b32.cont [8/16] 0.0, 128
    %837 = vxpose.xlu0.b32.cont [9/16] 0.0, 128
    %838 = vxpose.xlu0.b32.cont [10/16] 0.0, 128
    %839 = vxpose.xlu0.b32.cont [11/16] 0.0, 128
    %840 = vxpose.xlu0.b32.cont [12/16] 0.0, 128
    %841 = vxpose.xlu0.b32.cont [13/16] 0.0, 128
    %842 = vxpose.xlu0.b32.cont [14/16] 0.0, 128
    %843 = vxpose.xlu0.b32.cont [15/16] 0.0, 128
    %844 = vxpose.xlu0.b32.end [16/16] 0.0, 128
    %v845 = vpop.trf.xlu0
    %v846 = vpop.trf.xlu0
    %v847 = vpop.trf.xlu0
    %v848 = vpop.trf.xlu0
    %v849 = vpop.trf.xlu0
    %v850 = vpop.trf.xlu0
    %v851 = vpop.trf.xlu0
    %v852 = vpop.trf.xlu0
    %v853 = vpop.trf.xlu0
    %v854 = vpop.trf.xlu0
    %v855 = vpop.trf.xlu0
    %v856 = vpop.trf.xlu0
    %v857 = vpop.trf.xlu0
    %v858 = vpop.trf.xlu0
    %v859 = vpop.trf.xlu0
    %v860 = vpop.trf.xlu0
    %v862 = vsel %vm291, %v845, 0
    %v865 = vsel %vm291, %v846, 0
    %v868 = vsel %vm291, %v847, 0
    %v871 = vsel %vm291, %v848, 0
    %873 = vmatprep.subr.mxu0 0.0
    %874 = vmatpush1.msra.mxu0 %v825
    %875 = vmatprep.subr.mxu0 0.0
    %876 = vmatpush1.msra.mxu0 %v826
    %877 = vmatprep.subr.mxu0 0.0
    %878 = vmatpush1.msra.mxu0 %v827
    %879 = vmatprep.subr.mxu0 0.0
    %880 = vmatpush1.msra.mxu0 %v828
    %881 = vmatprep.subr.mxu0 0.0
    %882 = vmatpush1.msra.mxu0 0.0
    %883 = vmatprep.subr.mxu0 0.0
    %884 = vmatpush1.msra.mxu0 0.0
    %885 = vmatprep.subr.mxu0 0.0
    %886 = vmatpush1.msra.mxu0 0.0
    %887 = vmatprep.subr.mxu0 0.0
    %888 = vmatpush1.msra.mxu0 0.0
    %889 = vmatprep.subr.mxu0 0.0
    %890 = vmatpush1.msra.mxu0 0.0
    %891 = vmatprep.subr.mxu0 0.0
    %892 = vmatpush1.msra.mxu0 0.0
    %893 = vmatprep.subr.mxu0 0.0
    %894 = vmatpush1.msra.mxu0 0.0
    %895 = vmatprep.subr.mxu0 0.0
    %896 = vmatpush1.msra.mxu0 0.0
    %897 = vmatprep.subr.mxu0 0.0
    %898 = vmatpush1.msra.mxu0 0.0
    %899 = vmatprep.subr.mxu0 0.0
    %900 = vmatpush1.msra.mxu0 0.0
    %901 = vmatprep.subr.mxu0 0.0
    %902 = vmatpush1.msra.mxu0 0.0
    %903 = vmatprep.subr.mxu0 0.0
    %904 = vmatpush1.msra.mxu0 0.0
    %905 = vmatprep.subr.mxu0 0.0
    %906 = vmatpush1.msra.mxu0 0.0
    %907 = vmatprep.subr.mxu0 0.0
    %908 = vmatpush1.msra.mxu0 0.0
    %909 = vmatprep.subr.mxu0 0.0
    %910 = vmatpush1.msra.mxu0 0.0
    %911 = vmatprep.subr.mxu0 0.0
    %912 = vmatpush1.msra.mxu0 0.0
    %913 = vmatprep.subr.mxu0 0.0
    %914 = vmatpush1.msra.mxu0 0.0
    %915 = vmatprep.subr.mxu0 0.0
    %916 = vmatpush1.msra.mxu0 0.0
    %917 = vmatprep.subr.mxu0 0.0
    %918 = vmatpush1.msra.mxu0 0.0
    %919 = vmatprep.subr.mxu0 0.0
    %920 = vmatpush1.msra.mxu0 0.0
    %921 = vmatprep.subr.mxu0 0.0
    %922 = vmatpush1.msra.mxu0 0.0
    %923 = vmatprep.subr.mxu0 0.0
    %924 = vmatpush1.msra.mxu0 0.0
    %925 = vmatprep.subr.mxu0 0.0
    %926 = vmatpush1.msra.mxu0 0.0
    %927 = vmatprep.subr.mxu0 0.0
    %928 = vmatpush1.msra.mxu0 0.0
    %929 = vmatprep.subr.mxu0 0.0
    %930 = vmatpush1.msra.mxu0 0.0
    %931 = vmatprep.subr.mxu0 0.0
    %932 = vmatpush1.msra.mxu0 0.0
    %933 = vmatprep.subr.mxu0 0.0
    %934 = vmatpush1.msra.mxu0 0.0
    %935 = vmatprep.subr.mxu0 0.0
    %936 = vmatpush1.msra.mxu0 0.0
    %937 = vmatprep.mubr.f32.mxu0 0.0
    %938 = vmatmul.mubr.f32.gmra.mrb[0].mxu0 %v862
    %v939 = vpop.f32.mrb[0].mxu0
    %v940 = vadd.f32 0.0, %v939
    %v941 = vpop.f32.mrb[0].mxu0
    %942 = vmatprep.mubr.f32.mxu0 0.0
    %943 = vmatmul.mubr.f32.gmra.mrb[0].mxu0 %v865
    %v944 = vpop.f32.mrb[0].mxu0
    %v945 = vadd.f32 0.0, %v944
    %v946 = vpop.f32.mrb[0].mxu0
    %947 = vmatprep.mubr.f32.mxu0 0.0
    %948 = vmatmul.mubr.f32.gmra.mrb[0].mxu0 %v868
    %v949 = vpop.f32.mrb[0].mxu0
    %v950 = vadd.f32 0.0, %v949
    %v951 = vpop.f32.mrb[0].mxu0
    %952 = vmatprep.mubr.f32.mxu0 0.0
    %953 = vmatmul.mubr.f32.gmra.mrb[0].mxu0 %v871
    %v954 = vpop.f32.mrb[0].mxu0
    %v955 = vadd.f32 0.0, %v954
    %v956 = vpop.f32.mrb[0].mxu0
    %957 = vdwg.mxu0
    %v958 = vmul.f32 %v259, %v259
    %v959 = vmul.f32 %v260, %v260
    %v960 = vmul.f32 %v261, %v261
    %v961 = vmul.f32 %v262, %v262
    %v962 = vsub.f32 1.0, %v958
    %v963 = vsub.f32 1.0, %v959
    %v964 = vsub.f32 1.0, %v960
    %v965 = vsub.f32 1.0, %v961
    %v966 = vmul.f32 %v940, %v962
    %v967 = vmul.f32 %v945, %v963
    %v968 = vmul.f32 %v950, %v964
    %v969 = vmul.f32 %v955, %v965
    %970 = vxpose.xlu0.b32.start [1/16] %v129, 128
    %971 = vxpose.xlu0.b32.cont [2/16] %v130, 128
    %972 = vxpose.xlu0.b32.cont [3/16] %v131, 128
    %973 = vxpose.xlu0.b32.cont [4/16] %v132, 128
    %974 = vxpose.xlu0.b32.cont [5/16] 0.0, 128
    %975 = vxpose.xlu0.b32.cont [6/16] 0.0, 128
    %976 = vxpose.xlu0.b32.cont [7/16] 0.0, 128
    %977 = vxpose.xlu0.b32.cont [8/16] 0.0, 128
    %978 = vxpose.xlu0.b32.cont [9/16] 0.0, 128
    %979 = vxpose.xlu0.b32.cont [10/16] 0.0, 128
    %980 = vxpose.xlu0.b32.cont [11/16] 0.0, 128
    %981 = vxpose.xlu0.b32.cont [12/16] 0.0, 128
    %982 = vxpose.xlu0.b32.cont [13/16] 0.0, 128
    %983 = vxpose.xlu0.b32.cont [14/16] 0.0, 128
    %984 = vxpose.xlu0.b32.cont [15/16] 0.0, 128
    %985 = vxpose.xlu0.b32.end [16/16] 0.0, 128
    %v986 = vpop.trf.xlu0
    %v987 = vpop.trf.xlu0
    %v988 = vpop.trf.xlu0
    %v989 = vpop.trf.xlu0
    %v990 = vpop.trf.xlu0
    %v991 = vpop.trf.xlu0
    %v992 = vpop.trf.xlu0
    %v993 = vpop.trf.xlu0
    %v994 = vpop.trf.xlu0
    %v995 = vpop.trf.xlu0
    %v996 = vpop.trf.xlu0
    %v997 = vpop.trf.xlu0
    %v998 = vpop.trf.xlu0
    %v999 = vpop.trf.xlu0
    %v1000 = vpop.trf.xlu0
    %v1001 = vpop.trf.xlu0
    %v1003 = vsel %vm291, %v986, 0
    %1005 = vmatprep.subr.mxu0 0.0
    %1006 = vmatpush1.msra.mxu0 %v966
    %1007 = vmatprep.subr.mxu0 0.0
    %1008 = vmatpush1.msra.mxu0 %v967
    %1009 = vmatprep.subr.mxu0 0.0
    %1010 = vmatpush1.msra.mxu0 %v968
    %1011 = vmatprep.subr.mxu0 0.0
    %1012 = vmatpush1.msra.mxu0 %v969
    %1013 = vmatprep.subr.mxu0 0.0
    %1014 = vmatpush1.msra.mxu0 0.0
    %1015 = vmatprep.subr.mxu0 0.0
    %1016 = vmatpush1.msra.mxu0 0.0
    %1017 = vmatprep.subr.mxu0 0.0
    %1018 = vmatpush1.msra.mxu0 0.0
    %1019 = vmatprep.subr.mxu0 0.0
    %1020 = vmatpush1.msra.mxu0 0.0
    %1021 = vmatprep.subr.mxu0 0.0
    %1022 = vmatpush1.msra.mxu0 0.0
    %1023 = vmatprep.subr.mxu0 0.0
    %1024 = vmatpush1.msra.mxu0 0.0
    %1025 = vmatprep.subr.mxu0 0.0
    %1026 = vmatpush1.msra.mxu0 0.0
    %1027 = vmatprep.subr.mxu0 0.0
    %1028 = vmatpush1.msra.mxu0 0.0
    %1029 = vmatprep.subr.mxu0 0.0
    %1030 = vmatpush1.msra.mxu0 0.0
    %1031 = vmatprep.subr.mxu0 0.0
    %1032 = vmatpush1.msra.mxu0 0.0
    %1033 = vmatprep.subr.mxu0 0.0
    %1034 = vmatpush1.msra.mxu0 0.0
    %1035 = vmatprep.subr.mxu0 0.0
    %1036 = vmatpush1.msra.mxu0 0.0
    %1037 = vmatprep.subr.mxu0 0.0
    %1038 = vmatpush1.msra.mxu0 0.0
    %1039 = vmatprep.subr.mxu0 0.0
    %1040 = vmatpush1.msra.mxu0 0.0
    %1041 = vmatprep.subr.mxu0 0.0
    %1042 = vmatpush1.msra.mxu0 0.0
    %1043 = vmatprep.subr.mxu0 0.0
    %1044 = vmatpush1.msra.mxu0 0.0
    %1045 = vmatprep.subr.mxu0 0.0
    %1046 = vmatpush1.msra.mxu0 0.0
    %1047 = vmatprep.subr.mxu0 0.0
    %1048 = vmatpush1.msra.mxu0 0.0
    %1049 = vmatprep.subr.mxu0 0.0
    %1050 = vmatpush1.msra.mxu0 0.0
    %1051 = vmatprep.subr.mxu0 0.0
    %1052 = vmatpush1.msra.mxu0 0.0
    %1053 = vmatprep.subr.mxu0 0.0
    %1054 = vmatpush1.msra.mxu0 0.0
    %1055 = vmatprep.subr.mxu0 0.0
    %1056 = vmatpush1.msra.mxu0 0.0
    %1057 = vmatprep.subr.mxu0 0.0
    %1058 = vmatpush1.msra.mxu0 0.0
    %1059 = vmatprep.subr.mxu0 0.0
    %1060 = vmatpush1.msra.mxu0 0.0
    %1061 = vmatprep.subr.mxu0 0.0
    %1062 = vmatpush1.msra.mxu0 0.0
    %1063 = vmatprep.subr.mxu0 0.0
    %1064 = vmatpush1.msra.mxu0 0.0
    %1065 = vmatprep.subr.mxu0 0.0
    %1066 = vmatpush1.msra.mxu0 0.0
    %1067 = vmatprep.subr.mxu0 0.0
    %1068 = vmatpush1.msra.mxu0 0.0
    %1069 = vmatprep.mubr.f32.mxu0 0.0
    %1070 = vmatmul.mubr.f32.gmra.mrb[0].mxu0 %v1003
    %v1071 = vpop.f32.mrb[0].mxu0
    %v1072 = vadd.f32 0.0, %v1071
    %v1073 = vpop.f32.mrb[0].mxu0
    %1074 = vdwg.mxu0
    %v1075 = vand.u32 2147483647, %v24
    %vm1076 = vcmp.le.f32.partialorder %v1075, 0.7853982
    %vm1077 = vcmp.lt.s32.totalorder %v24, 0
    %v1078 = vand.u32 %v24, 2139095040
    %v1079 = vshrl.u32 %v1078, 23
    %v1080 = vsub.s32 %v1079, 127
    %v1081 = vand.u32 2147483647, %v24
    %v1082 = vand.u32 %v1081, 8388607
    %v1083 = vor.u32 %v1082, 8388608
    %v1084 = vsub.s32 0, %v1083
    %v1085 = vadd.s32 %v1080, 1
    %vm1086 = vcmp.gt.s32.totalorder %v1085, 0
    %v1087 = vsel %vm1086, %v1085, 0
    %v1088 = vshrl.u32 %v1087, 5
    %v1089 = vand.u32 %v1087, 31
    %v1090 = vsub.s32 32, %v1089
    %v1091 = vshrl.u32 683565275, %v1090
    %v1092 = vshll.u32 683565275, %v1089
    %v1093 = vshrl.u32 2475754826, %v1090
    %v1094 = vor.u32 %v1092, %v1093
    %v1095 = vshll.u32 2475754826, %v1089
    %v1096 = vshrl.u32 2131351028, %v1090
    %v1097 = vor.u32 %v1095, %v1096
    %v1098 = vshll.u32 2131351028, %v1089
    %v1099 = vshrl.u32 2102212464, %v1090
    %v1100 = vor.u32 %v1098, %v1099
    %v1101 = vshll.u32 2102212464, %v1089
    %v1102 = vshrl.u32 920167782, %v1090
    %v1103 = vor.u32 %v1101, %v1102
    %v1104 = vshll.u32 920167782, %v1089
    %v1105 = vshrl.u32 1326507024, %v1090
    %v1106 = vor.u32 %v1104, %v1105
    %vm1107 = vcmp.lt.s32.totalorder %v1088, 1
    %vm1108 = vcmp.lt.s32.totalorder %v1088, 2
    %vm1109 = vcmp.lt.s32.totalorder %v1088, 3
    %vm1110 = vcmp.lt.s32.totalorder %v1088, 4
    %v1111 = vsel %vm1107, %v1091, %v1094
    %v1112 = vsel %vm1110, %v1100, 2102212464
    %v1113 = vsel %vm1109, %v1097, %v1112
    %v1114 = vsel %vm1108, %v1111, %v1113
    %v1115 = vsel %vm1107, %v1094, %v1097
    %v1116 = vsel %vm1110, %v1103, 920167782
    %v1117 = vsel %vm1109, %v1100, %v1116
    %v1118 = vsel %vm1108, %v1115, %v1117
    %v1119 = vsel %vm1107, %v1097, %v1100
    %v1120 = vsel %vm1110, %v1106, 1326507024
    %v1121 = vsel %vm1109, %v1103, %v1120
    %v1122 = vsel %vm1108, %v1119, %v1121
    %v1123 = vshll.u32 %v1083, 8
    %v1124 = vmul.u32.u64.compose %v1123, %v1122
    %v1125 = vextract.low.u32 %v1124
    %v1126 = vextract.high.u32 %v1124
    %v1127 = vmul.u32.u64.compose %v1123, %v1118
    %v1128 = vextract.low.u32 %v1127
    %v1129 = vextract.high.u32 %v1127
    %v1130 = vmul.u32 %v1123, %v1114
    %v1131 = vadd.s32 %v1126, %v1128
    %vm1132 = vc.u32 %v1126, %v1128
    %v1133 = vadd.s32 %v1129, 1
    %v1134 = vsel %vm1132, %v1133, %v1129
    %v1135 = vadd.s32 %v1130, %v1134
    %v1136 = vadd.s32 %v1135, 536870912
    %v1137 = vshrl.u32 %v1136, 30
    %v1138 = vshll.u32 %v1137, 30
    %v1139 = vsub.s32 %v1135, %v1138
    %vm1140 = vcmp.lt.s32.totalorder %v1139, 0
    %v1141 = vsub.s32 0, %v1139
    %v1142 = vsel %vm1140, %v1141, %v1139
    %v1143 = vclz %v1142
    %v1144 = vsub.s32 %v1143, 2
    %vm1145 = vcmp.gt.s32.totalorder 0, %v1144
    %v1146 = vsel %vm1145, 0, %v1144
    %v1147 = vsub.s32 32, %v1146
    %v1148 = vshll.u32 %v1139, %v1146
    %v1149 = vshrl.u32 %v1131, %v1147
    %v1150 = vor.u32 %v1148, %v1149
    %v1151 = vsub.s32 4294967266, %v1146
    %v1152 = vadd.s32 %v1151, 127
    %v1153 = vshll.u32 %v1152, 23
    %v1154 = vor.u32 4788187, %v1153
    %v1155 = vand.u32 2147483647, %v1154
    %v1157 = vcvt.s32.f32 %v1150
    %v1158 = vmul.f32 %v1157, %v1155
    %v1159 = vxor.u32 %v1158, 2147483648
    %v1160 = vsel %vm1077, %v1159, %v1158
    %v1161 = vsub.s32 4, %v1137
    %v1162 = vsel %vm1077, %v1161, %v1137
    %v1163 = vsel %vm1076, %v24, %v1160
    %v1164 = vsel %vm1076, 0, %v1162
    %v1165 = vcosq.f32.pop %v1163
    %v1166 = vsinq.f32.pop %v1163
    %vm1167 = vweird.f32 %v24
    %v1168 = vand.u32 %v1164, 3
    %vm1169 = vcmp.lt.s32.totalorder %v1168, 2
    %vm1170 = vcmp.eq.s32.totalorder %v1168, 0
    %v1171 = vxor.u32 %v1166, 2147483648
    %v1172 = vsel %vm1170, %v1165, %v1171
    %vm1173 = vcmp.eq.s32.totalorder %v1168, 2
    %v1174 = vxor.u32 %v1165, 2147483648
    %v1175 = vsel %vm1173, %v1174, %v1166
    %v1176 = vsel %vm1169, %v1172, %v1175
    %v1177 = vsel %vm1167, nan, %v1176
    %v1178 = vmul.f32 %v1072, %v1177
    %1179 = vst [vmem:[#allocation2 - $0x2] sm:$0xc] %v1178
    %v1180 = vsub.f32 0.0, %v1178
    %1181 = vst [vmem:[#allocation2 + $0x2] sm:$0x3] %v1180
    // Predicated region
    $region26: #{tpu_custom_call.1} parent=1 // pred_check
      _
    $region27: #{tpu_custom_call.1} parent=1 // pred_check_branch
      %1183 = sbr.rel (0) target = $region29
    $region28: #{tpu_custom_call.1} parent=1 // pred_region
      %s1185 = ssub.s32 64, 64
      %1186 = vsyncadd [#allocation3], %s1185
      %s1188 = sshll.u32 [#allocation2], 4
      %s1189 = int_to_ptr.vmem [resolvable:$true] %s1188
      %1191 = dma.vmem_to_hbm [thread:$0]  %s1189, 64, %s6, [#allocation3]
    $region29: #{tpu_custom_call.1} parent=1 // pred_fallthru
      _
    // Predicated region
    $region30: #{tpu_custom_call.1} parent=1 // pred_check
      _
    $region31: #{tpu_custom_call.1} parent=1 // pred_check_branch
      %1193 = sbr.rel (0) target = $region33
    $region32: #{tpu_custom_call.1} parent=1 // pred_region
      %1194 = dma.done [#allocation3], 64
    $region33: #{tpu_custom_call.1} parent=1 // pred_fallthru
      _
    %1195 = vsyncpa [#allocation3], 1

</llo_original>
